<compile_context>
chip_gen: v7x
topology: tpu7x:2x2x1
jax: 0.10.0
libtpu: 0.0.40
codegen_flags: <defaults>
</compile_context>

<pallas_src>
import jax
import jax.numpy as jnp
from jax import lax
from jax.experimental import pallas as pl
from jax.experimental.pallas import tpu as pltpu

LANES = 128        # lane width of a vreg row
ROW_TILE = 256     # (256, 128) f32 block = 128 KiB per pipeline buffer


def _cxcywh_to_xyxy_kernel(x_ref, o_ref):
    """x_ref/o_ref: (rows, 128) tile of the flattened (..., 4) box tensor.

    Lane l holds channel (l % 4) of some box, i.e. rows are [cx,cy,w,h] quads.
    """
    x = x_ref[...].astype(jnp.float32)                     # one full-tile load, cast in vregs

    # Neighbour-channel views via circular lane rotations (XLU slot, ~free):
    #   roll(x, 126)[l] == x[l+2]  -> w/h value aligned under the cx/cy lanes
    #   roll(x,   2)[l] == x[l-2]  -> cx/cy value aligned under the w/h lanes
    # Wrapped lanes only land in the branch that does not use them.
    wh_at_cxcy = pltpu.roll(x, LANES - 2, 1)
    cxcy_at_wh = pltpu.roll(x, 2, 1)

    lane = lax.broadcasted_iota(jnp.int32, x.shape, 1)
    is_min_corner = (lane % 4) < 2                         # lanes holding cx / cy
    out = jnp.where(is_min_corner,
                    x - 0.5 * wh_at_cxcy,                  # x1 = cx - w/2, y1 = cy - h/2
                    cxcy_at_wh + 0.5 * x)                  # x2 = cx + w/2, y2 = cy + h/2

    o_ref[...] = out.astype(o_ref.dtype)                   # one unmasked full-tile store


def cxcywh_to_xyxy(boxes):
    """torchvision.ops.box_convert(boxes, 'cxcywh', 'xyxy') for a (..., 4) tensor."""
    if boxes.shape[-1] != 4:
        raise ValueError("last dimension must be 4 (cx, cy, w, h)")
    shape = boxes.shape
    dtype = boxes.dtype

    n_elems = 1
    for s in shape:
        n_elems *= s                                       # num_boxes * 4
    if n_elems == 0:
        return boxes

    # Flatten to a lane-dense 2-D view (no transposes, no dtype pre-cast).
    flat = boxes.reshape(n_elems)

    # Row tile: big enough for pipelined HBM streaming, small enough for VMEM.
    rows = pl.cdiv(n_elems, LANES)
    row_tile = ROW_TILE if rows >= ROW_TILE else ((rows + 7) // 8) * 8
    padded_rows = pl.cdiv(rows, row_tile) * row_tile
    padded_elems = padded_rows * LANES
    if padded_elems != n_elems:
        # zero padding starts on a quad boundary (n_elems % 4 == 0), converts to
        # zeros, and is sliced off below.
        flat = jnp.pad(flat, (0, padded_elems - n_elems))
    x2d = flat.reshape(padded_rows, LANES)

    out = pl.pallas_call(
        _cxcywh_to_xyxy_kernel,
        out_shape=jax.ShapeDtypeStruct((padded_rows, LANES), dtype),
        grid=(padded_rows // row_tile,),
        in_specs=[pl.BlockSpec((row_tile, LANES), lambda i: (i, 0))],
        out_specs=pl.BlockSpec((row_tile, LANES), lambda i: (i, 0)),
        compiler_params=pltpu.CompilerParams(
            dimension_semantics=("parallel",)),            # both TCs on v7x
    )(x2d)

    return out.reshape(padded_elems)[:n_elems].reshape(shape)


if __name__ == "__main__":
    key = jax.random.PRNGKey(0)
    k1, k2 = jax.random.split(key)

    def ref_convert(b):
        b32 = b.astype(jnp.float32)
        return jnp.concatenate([b32[..., :2] - 0.5 * b32[..., 2:],
                                b32[..., :2] + 0.5 * b32[..., 2:]], axis=-1)

    # f32 boxes, shape consistent with the module's (..., 4) contract
    boxes = jax.random.uniform(k1, (2, 64, 4), minval=1.0, maxval=32.0,
                               dtype=jnp.float32)
    xyxy = jax.jit(cxcywh_to_xyxy)(boxes)
    jax.block_until_ready(xyxy)
    assert xyxy.shape == boxes.shape and xyxy.dtype == boxes.dtype
    assert jnp.allclose(xyxy, ref_convert(boxes), atol=1e-5), "f32 mismatch"

    # ragged box count (exercises the padding / tail handling)
    boxes2 = jax.random.uniform(k2, (3, 50, 4), minval=0.0, maxval=64.0,
                                dtype=jnp.float32)
    xyxy2 = jax.jit(cxcywh_to_xyxy)(boxes2)
    jax.block_until_ready(xyxy2)
    assert jnp.allclose(xyxy2, ref_convert(boxes2), atol=1e-5), "padded mismatch"

    # sub-f32 dtype: DMA'd natively, cast to f32 only inside the kernel
    boxes_bf16 = boxes.astype(jnp.bfloat16)
    xyxy_bf16 = jax.jit(cxcywh_to_xyxy)(boxes_bf16)
    jax.block_until_ready(xyxy_bf16)
    assert xyxy_bf16.dtype == jnp.bfloat16
    assert jnp.allclose(xyxy_bf16.astype(jnp.float32), ref_convert(boxes_bf16),
                        atol=0.5), "bf16 mismatch"

    print("KERNEL_OK")
</pallas_src>

<mosaic_0001>
module attributes {stable_mosaic.version = 11 : i64} {
  func.func @_cxcywh_to_xyxy_kernel(%arg0: i32, %arg1: memref<8x128xf32, #tpu.memory_space<vmem>>, %arg2: memref<8x128xf32, #tpu.memory_space<vmem>>) attributes {dimension_semantics = [#tpu.dimension_semantics<parallel>], iteration_bounds = array<i64: 1>, scalar_prefetch = 0 : i64, scratch_operands = 0 : i64, tpu.core_type = #tpu.core_type<tc>, window_params = [{transform_indices = @transform_0, window_bounds = array<i64: 8, 128>}, {transform_indices = @transform_1, window_bounds = array<i64: 8, 128>}]} {
    %c0 = arith.constant 0 : index
    %c0_0 = arith.constant 0 : index
    %0 = vector.load %arg1[%c0, %c0_0] : memref<8x128xf32, #tpu.memory_space<vmem>>, vector<8x128xf32>
    %c126_i32 = arith.constant 126 : i32
    %1 = tpu.dynamic_rotate %0 by %c126_i32 dim 1 : vector<8x128xf32>, i32 -> vector<8x128xf32>
    %c2_i32 = arith.constant 2 : i32
    %2 = tpu.dynamic_rotate %0 by %c2_i32 dim 1 : vector<8x128xf32>, i32 -> vector<8x128xf32>
    %3 = tpu.iota {dimensions = array<i32: 1>} : vector<8x128xi32>
    %c4_i32 = arith.constant 4 : i32
    %c0_i32 = arith.constant 0 : i32
    %4 = arith.cmpi eq, %c4_i32, %c0_i32 : i32
    %c1_i32 = arith.constant 1 : i32
    %5 = arith.select %4, %c1_i32, %c4_i32 : i32
    %6 = vector.broadcast %5 : i32 to vector<8x128xi32>
    %7 = arith.remsi %3, %6 : vector<8x128xi32>
    %c0_i32_1 = arith.constant 0 : i32
    %8 = vector.broadcast %c0_i32_1 : i32 to vector<8x128xi32>
    %9 = arith.cmpi ne, %7, %8 : vector<8x128xi32>
    %c0_i32_2 = arith.constant 0 : i32
    %10 = vector.broadcast %c0_i32_2 : i32 to vector<8x128xi32>
    %11 = arith.cmpi slt, %7, %10 : vector<8x128xi32>
    %c0_i32_3 = arith.constant 0 : i32
    %12 = arith.cmpi slt, %5, %c0_i32_3 : i32
    %13 = vector.broadcast %12 : i1 to vector<8x128xi1>
    %14 = vector.broadcast %13 : vector<8x128xi1> to vector<8x128xi1>
    %15 = arith.xori %11, %14 : vector<8x128xi1>
    %16 = arith.andi %15, %9 : vector<8x128xi1>
    %17 = vector.broadcast %5 : i32 to vector<8x128xi32>
    %18 = arith.addi %7, %17 : vector<8x128xi32>
    %19 = arith.select %16, %18, %7 : vector<8x128xi1>, vector<8x128xi32>
    %c2_i32_4 = arith.constant 2 : i32
    %20 = vector.broadcast %c2_i32_4 : i32 to vector<8x128xi32>
    %21 = arith.cmpi slt, %19, %20 : vector<8x128xi32>
    %cst = arith.constant 5.000000e-01 : f32
    %22 = vector.broadcast %cst : f32 to vector<8x128xf32>
    %23 = arith.mulf %22, %1 : vector<8x128xf32>
    %24 = arith.subf %0, %23 : vector<8x128xf32>
    %cst_5 = arith.constant 5.000000e-01 : f32
    %25 = vector.broadcast %cst_5 : f32 to vector<8x128xf32>
    %26 = arith.mulf %25, %0 : vector<8x128xf32>
    %27 = arith.addf %2, %26 : vector<8x128xf32>
    %28 = arith.select %21, %24, %27 : vector<8x128xi1>, vector<8x128xf32>
    %c0_6 = arith.constant 0 : index
    %c0_7 = arith.constant 0 : index
    %29 = vector.load %arg2[%c0_6, %c0_7] : memref<8x128xf32, #tpu.memory_space<vmem>>, vector<8x128xf32>
    tpu.vector_store %arg2[%c0_6, %c0_7], %28 {strides = array<i32>} : memref<8x128xf32, #tpu.memory_space<vmem>>, vector<8x128xf32>,
    return
  }
  func.func @transform_0(%arg0: i32) -> (i32, i32) {
    %c0_i32 = arith.constant 0 : i32
    %c0_i32_0 = arith.constant 0 : i32
    return %arg0, %c0_i32 : i32, i32
  }
  func.func @transform_1(%arg0: i32) -> (i32, i32) {
    %c0_i32 = arith.constant 0 : i32
    %c0_i32_0 = arith.constant 0 : i32
    return %arg0, %c0_i32 : i32, i32
  }
}

</mosaic_0001>

<llo_original>
// kernel: cxcywh_to_xyxy.1
$region0: #{cxcywh_to_xyxy.1}
  #allocation0 [shape = 'u32[]', space=smem, size = 0x4, offset = 0x4, fixed_abs, tag = 'smem constant byte address 0x4 - core index']
  #allocation1 [shape = 'u32[144,128]{1,0:T(1,128)}', space=vmem, size = 0x12000, scoped, tag = 'internal scratch']
  %s0 = inlined_call_operand.vmem [shape: f32[8,128], index: 0, kind: input, shape index: {}]
  %s1 = inlined_call_operand.vmem [shape: f32[8,128], index: 1, kind: output, shape index: {}]
  %s2 = sld [smem:[#allocation0]]
  $region14: #{cxcywh_to_xyxy.1} parent=0
    _
  %s4 = ssub.s32 1, %s2
  %s5 = scalar_select 0, %s4, %s2
  // Predicated region
  $region2: #{cxcywh_to_xyxy.1} parent=0 // pred_check
    _
  $region3: #{cxcywh_to_xyxy.1} parent=0 // pred_check_branch
    %7 = sbr.rel (0) target = $region5
  $region4: #{cxcywh_to_xyxy.1} parent=0 // pred_region
    _
  $region5: #{cxcywh_to_xyxy.1} parent=0 // pred_fallthru
    _
  %v8 = vld [vmem:[%s0] sm:$0xff]
  %9 = vrot.lane.b32.xlu0 %v8, 126
  %v10 = vpop.permute.xlu0 %9
  %11 = vrot.lane.b32.xlu0 %v8, 2
  %v12 = vpop.permute.xlu0 %11
  %v13 = vlaneseq
  %v14 = vand.u32 %v13, 127
  %vm15 = vcmp.lt.s32.totalorder %v14, 0
  %v16 = vsub.s32 0, %v14
  %v17 = vsel %vm15, %v16, %v14
  %v18 = vshrl.u32 %v17, 2
  %v19 = vand.u32 %v17, 3
  %v20 = vsub.s32 0, %v19
  %v21 = vsel %vm15, %v20, %v19
  %vm22 = vcmp.ne.s32.totalorder %v21, 0
  %vm23 = vcmp.lt.s32.totalorder %v21, 0
  %vm24 = vmand %vm23, %vm22
  %v25 = vadd.s32 %v21, 4
  %v26 = vsel %vm24, %v25, %v21
  %vm27 = vcmp.lt.s32.totalorder %v26, 2
  %v28 = vmul.f32 %v10, 0.5
  %v29 = vsub.f32 %v8, %v28
  %v30 = vmul.f32 %v8, 0.5
  %v31 = vadd.f32 %v12, %v30
  %v32 = vsel %vm27, %v29, %v31
  %33 = vst [vmem:[%s1] sm:$0xff] %v32
  // Predicated region
  $region6: #{cxcywh_to_xyxy.1} parent=0 // pred_check
    _
  $region7: #{cxcywh_to_xyxy.1} parent=0 // pred_check_branch
    %35 = sbr.rel (0) target = $region9
  $region8: #{cxcywh_to_xyxy.1} parent=0 // pred_region
    _
  $region9: #{cxcywh_to_xyxy.1} parent=0 // pred_fallthru
    _
  // Predicated region
  $region10: #{cxcywh_to_xyxy.1} parent=0 // pred_check
    _
  $region11: #{cxcywh_to_xyxy.1} parent=0 // pred_check_branch
    %37 = sbr.rel (0) target = $region13
  $region12: #{cxcywh_to_xyxy.1} parent=0 // pred_region
    _
  $region13: #{cxcywh_to_xyxy.1} parent=0 // pred_fallthru
    _

</llo_original>
